<compile_context>
chip_gen: v7x
topology: tpu7x:2x2x1
jax: 0.10.0
libtpu: 0.0.40
codegen_flags: <defaults>
</compile_context>

<pallas_src>
import functools
import math

import numpy as np
import jax
import jax.numpy as jnp
from jax.experimental import pallas as pl
from jax.experimental.pallas import tpu as pltpu


def _round_up(a: int, b: int) -> int:
    return ((a + b - 1) // b) * b


def _plan_tiles(n, nfeat, nclass, tile_m, tile_k, in_bytes, num_outputs,
                vmem_budget=24 << 20):
    """Pick (tile_m, tile_k, num_k).  num_k == 1 means a single, unpadded K block."""
    if tile_m is None:
        tile_m = 512
    tile_m = min(tile_m, _round_up(n, 8))
    if n >= 16:
        # At least 2 M tiles so the 'parallel' batch axis can use both v7x TensorCores.
        tile_m = min(tile_m, _round_up(pl.cdiv(n, 2), 8))
    tile_m = max(8, _round_up(tile_m, 8))

    c_v = _round_up(nclass, 128)
    # VMEM already committed to double-buffered outputs, the accumulator and the bias.
    fixed = (2 * num_outputs + 1) * tile_m * c_v * 4 + 8 * c_v * 4
    avail = max(vmem_budget - fixed, 1 << 20)
    # Per unit of K: double-buffered x-tile rows + double-buffered W rows.
    per_k = 2 * (tile_m + c_v) * in_bytes
    k_cap = max(128, int(avail // per_k))

    if tile_k is None:
        tile_k = nfeat
    tile_k = min(tile_k, nfeat, k_cap)
    if tile_k >= nfeat:
        return tile_m, nfeat, 1                       # single K block, no K padding
    tile_k = max(128, (tile_k // 128) * 128)
    num_k = pl.cdiv(nfeat, tile_k)
    if num_k == 1:
        return tile_m, nfeat, 1
    return tile_m, tile_k, num_k


def _mlp_kernel(x_ref, w_ref, b_ref, *rest, store_logits, multi_k):
    """rest = (logp_ref[, logits_ref][, acc_ref])."""
    if multi_k:
        acc_ref = rest[-1]
        out_refs = rest[:-1]
    else:
        acc_ref = None
        out_refs = rest
    logp_ref = out_refs[0]

    # MXU matmul with f32 accumulation.
    part = jnp.dot(x_ref[...], w_ref[...], preferred_element_type=jnp.float32)

    def _finalize(acc_f32):
        logits = acc_f32 + b_ref[...]                 # bias broadcast (f32)
        if store_logits:
            out_refs[1][...] = logits.astype(out_refs[1].dtype)
        # Numerically stable log-softmax over the class axis.  Row reductions run on
        # the XLU and exp on the EUP — free filler under the matmul/store critical path.
        m = jnp.max(logits, axis=1, keepdims=True)
        shifted = logits - m
        lse = jnp.log(jnp.sum(jnp.exp(shifted), axis=1, keepdims=True))
        logp_ref[...] = (shifted - lse).astype(logp_ref.dtype)

    if not multi_k:
        _finalize(part)                               # single-K: bypass the accumulator
    else:
        k = pl.program_id(1)

        @pl.when(k == 0)
        def _():
            acc_ref[...] = part                       # first step writes (no zero-fill)

        @pl.when(k > 0)
        def _():
            acc_ref[...] += part

        @pl.when(k == pl.num_programs(1) - 1)
        def _():
            _finalize(acc_ref[...])


def mlp_classifier(x, weight, bias, *, tile_m=None, tile_k=None,
                   return_logits=True, mxu_dtype=None):
    """x: [N, nfeat]; weight: [nfeat, nclass]; bias: [nclass].

    Returns (log_softmax(x @ W + b, axis=1), x @ W + b).  If return_logits=False the
    second element is None and its HBM writeback is skipped entirely.
    """
    n, nfeat = x.shape
    nclass = weight.shape[1]
    out_dtype = x.dtype

    if mxu_dtype is not None:                         # optional bf16 MXU feed
        x = x.astype(mxu_dtype)
        weight = weight.astype(mxu_dtype)
    in_bytes = np.dtype(x.dtype).itemsize
    out_bytes = np.dtype(out_dtype).itemsize
    num_outputs = 2 if return_logits else 1

    tile_m, tile_k, num_k = _plan_tiles(n, nfeat, nclass, tile_m, tile_k,
                                        in_bytes, num_outputs)
    num_m = pl.cdiv(n, tile_m)

    b2d = bias.reshape(1, nclass).astype(jnp.float32)

    if num_k == 1:
        x_in, w_in = x, weight
        grid = (num_m,)
        in_specs = [
            pl.BlockSpec((tile_m, nfeat), lambda i: (i, 0)),      # x row tile
            pl.BlockSpec((nfeat, nclass), lambda i: (0, 0)),      # W resident (1 fetch)
            pl.BlockSpec((1, nclass), lambda i: (0, 0)),          # bias resident
        ]
        out_specs = tuple(pl.BlockSpec((tile_m, nclass), lambda i: (i, 0))
                          for _ in range(num_outputs))
        scratch = []
        dims = ("parallel",)
    else:
        # K-reduction grid axis (last, "arbitrary").  Zero-pad K so every K block is
        # full — the only wrapper-side padding that is actually needed for correctness.
        k_pad = num_k * tile_k
        x_in = jnp.pad(x, ((0, 0), (0, k_pad - nfeat))) if k_pad != nfeat else x
        w_in = (jnp.pad(weight, ((0, k_pad - nfeat), (0, 0)))
                if k_pad != nfeat else weight)
        grid = (num_m, num_k)
        in_specs = [
            pl.BlockSpec((tile_m, tile_k), lambda i, k: (i, k)),
            pl.BlockSpec((tile_k, nclass), lambda i, k: (k, 0)),
            pl.BlockSpec((1, nclass), lambda i, k: (0, 0)),
        ]
        out_specs = tuple(pl.BlockSpec((tile_m, nclass), lambda i, k: (i, 0))
                          for _ in range(num_outputs))
        scratch = [pltpu.VMEM((tile_m, nclass), jnp.float32)]
        dims = ("parallel", "arbitrary")

    out_shape = tuple(jax.ShapeDtypeStruct((n, nclass), out_dtype)
                      for _ in range(num_outputs))

    # VMEM limit sized from actual (lane/sublane padded) block footprints, with
    # headroom, kept well under v7x's 64 MiB physical VMEM.
    k_blk = nfeat if num_k == 1 else tile_k
    c_v = _round_up(nclass, 128)
    est = (2 * tile_m * _round_up(k_blk, 128) * in_bytes          # x (double-buffered)
           + 2 * _round_up(k_blk, 8) * c_v * in_bytes             # W (double-buffered)
           + 2 * num_outputs * tile_m * c_v * out_bytes           # outputs
           + (tile_m * c_v * 4 if num_k > 1 else 0)               # accumulator
           + 8 * c_v * 4)                                         # bias
    vmem_limit = int(min(max(2 * est, 32 << 20), 48 << 20))

    kernel = functools.partial(_mlp_kernel, store_logits=return_logits,
                               multi_k=(num_k > 1))

    results = pl.pallas_call(
        kernel,
        out_shape=out_shape,
        grid_spec=pltpu.PrefetchScalarGridSpec(
            num_scalar_prefetch=0,
            grid=grid,
            in_specs=in_specs,
            out_specs=out_specs,
            scratch_shapes=scratch,
        ),
        compiler_params=pltpu.CompilerParams(
            dimension_semantics=dims,
            vmem_limit_bytes=vmem_limit,
        ),
    )(x_in, w_in, b2d)

    logp = results[0]
    logits = results[1] if return_logits else None
    return logp, logits


def init_params(key, nfeat, nclass):
    """Deterministic init mirroring Linear.reset_parameters shapes/ranges."""
    kw, kb = jax.random.split(key)
    # kaiming_uniform_(mode='fan_out', a=sqrt(5)) on weight of shape [nfeat, nclass]
    a = math.sqrt(5.0)
    gain = math.sqrt(2.0 / (1.0 + a * a))
    fan_out = nclass
    bound_w = gain * math.sqrt(3.0 / fan_out)
    weight = jax.random.uniform(kw, (nfeat, nclass), jnp.float32,
                                minval=-bound_w, maxval=bound_w)
    # bias ~ U(-stdv, stdv), stdv = 1/sqrt(out_features)
    stdv = 1.0 / math.sqrt(nclass)
    bias = jax.random.uniform(kb, (nclass,), jnp.float32,
                              minval=-stdv, maxval=stdv)
    return weight, bias


def _check(x, w, b, **kw):
    logp, logits = mlp_classifier(x, w, b, **kw)
    jax.block_until_ready(logp)

    # Accurate float64 reference (the kernel/XLA matmuls may use MXU pass precision).
    xr = np.asarray(x, np.float64)
    wr = np.asarray(w, np.float64)
    br = np.asarray(b, np.float64)
    ref_logits = xr @ wr + br
    m = ref_logits.max(axis=1, keepdims=True)
    ref_logp = ref_logits - m - np.log(np.exp(ref_logits - m).sum(axis=1, keepdims=True))

    assert np.allclose(np.asarray(logp, np.float64), ref_logp,
                       atol=5e-2, rtol=5e-2), "log-probs mismatch"
    if logits is not None:
        jax.block_until_ready(logits)
        assert np.allclose(np.asarray(logits, np.float64), ref_logits,
                           atol=5e-2, rtol=5e-2), "logits mismatch"
        # Tight consistency check of the in-kernel log-softmax epilogue.
        assert jnp.allclose(logp, jax.nn.log_softmax(logits, axis=1),
                            atol=1e-4, rtol=1e-4), "log-softmax epilogue mismatch"


if __name__ == "__main__":
    key = jax.random.PRNGKey(0)
    k1, k2, k3, k4 = jax.random.split(key, 4)

    # Case 1: single-K fast path, 3 M tiles (incl. a partial edge tile), small nclass.
    N1, F1, C1 = 80, 32, 10
    x1 = jax.random.normal(k1, (N1, F1), dtype=jnp.float32)
    w1, b1 = init_params(k2, F1, C1)
    _check(x1, w1, b1, tile_m=32)

    # Case 2: multi-K reduction path with K zero-padding (nfeat not a multiple of 128).
    N2, F2, C2 = 64, 300, 16
    x2 = jax.random.normal(k3, (N2, F2), dtype=jnp.float32)
    w2, b2 = init_params(k4, F2, C2)
    _check(x2, w2, b2, tile_m=512, tile_k=128)

    # Case 3: default tiling + logits output dropped (halves output HBM traffic).
    _check(x1, w1, b1, return_logits=False)

    print("KERNEL_OK")
</pallas_src>

<mosaic_0001>
module attributes {stable_mosaic.version = 11 : i64} {
  func.func @_mlp_kernel(%arg0: i32, %arg1: memref<32x32xf32, #tpu.memory_space<vmem>>, %arg2: memref<32x10xf32, #tpu.memory_space<vmem>>, %arg3: memref<1x10xf32, #tpu.memory_space<vmem>>, %arg4: memref<32x10xf32, #tpu.memory_space<vmem>>, %arg5: memref<32x10xf32, #tpu.memory_space<vmem>>) attributes {dimension_semantics = [#tpu.dimension_semantics<parallel>], iteration_bounds = array<i64: 3>, scalar_prefetch = 0 : i64, scratch_operands = 0 : i64, tpu.core_type = #tpu.core_type<tc>, window_params = [{transform_indices = @transform_0, window_bounds = array<i64: 32, 32>}, {pipeline_mode = #tpu.pipeline_mode<synchronous>, transform_indices = @transform_1, window_bounds = array<i64: 32, 10>}, {pipeline_mode = #tpu.pipeline_mode<synchronous>, transform_indices = @transform_2, window_bounds = array<i64: 1, 10>}, {transform_indices = @transform_3, window_bounds = array<i64: 32, 10>}, {transform_indices = @transform_4, window_bounds = array<i64: 32, 10>}]} {
    %c0 = arith.constant 0 : index
    %c0_0 = arith.constant 0 : index
    %0 = vector.load %arg1[%c0, %c0_0] : memref<32x32xf32, #tpu.memory_space<vmem>>, vector<32x32xf32>
    %c0_1 = arith.constant 0 : index
    %c0_2 = arith.constant 0 : index
    %1 = vector.load %arg2[%c0_1, %c0_2] : memref<32x10xf32, #tpu.memory_space<vmem>>, vector<32x10xf32>
    %cst = arith.constant dense<0.000000e+00> : vector<32x10xf32>
    %2 = tpu.matmul %0, %1, %cst {dimension_numbers = #tpu.dot_dimension_numbers<[1], [0], [0], [1], [0, 0, 1, 1], [], []>} : vector<32x32xf32>, vector<32x10xf32>, vector<32x10xf32> -> vector<32x10xf32>
    %c0_3 = arith.constant 0 : index
    %c0_4 = arith.constant 0 : index
    %3 = vector.load %arg3[%c0_3, %c0_4] : memref<1x10xf32, #tpu.memory_space<vmem>>, vector<1x10xf32>
    %4 = vector.broadcast %3 : vector<1x10xf32> to vector<32x10xf32>
    %5 = arith.addf %2, %4 : vector<32x10xf32>
    %c0_5 = arith.constant 0 : index
    %c0_6 = arith.constant 0 : index
    %6 = vector.load %arg5[%c0_5, %c0_6] : memref<32x10xf32, #tpu.memory_space<vmem>>, vector<32x10xf32>
    tpu.vector_store %arg5[%c0_5, %c0_6], %5 {strides = array<i32>} : memref<32x10xf32, #tpu.memory_space<vmem>>, vector<32x10xf32>,
    %cst_7 = arith.constant dense<0xFF800000> : vector<32xf32>
    %7 = vector.multi_reduction <maximumf>, %5, %cst_7 [1] : vector<32x10xf32> to vector<32xf32>
    %8 = vector.shape_cast %7 : vector<32xf32> to vector<32x1xf32>
    %9 = vector.broadcast %8 : vector<32x1xf32> to vector<32x10xf32>
    %10 = arith.subf %5, %9 : vector<32x10xf32>
    %11 = math.exp %10 : vector<32x10xf32>
    %cst_8 = arith.constant dense<0.000000e+00> : vector<32xf32>
    %12 = vector.multi_reduction <add>, %11, %cst_8 [1] : vector<32x10xf32> to vector<32xf32>
    %13 = vector.shape_cast %12 : vector<32xf32> to vector<32x1xf32>
    %14 = math.log %13 : vector<32x1xf32>
    %15 = vector.broadcast %14 : vector<32x1xf32> to vector<32x10xf32>
    %16 = arith.subf %10, %15 : vector<32x10xf32>
    %c0_9 = arith.constant 0 : index
    %c0_10 = arith.constant 0 : index
    %17 = vector.load %arg4[%c0_9, %c0_10] : memref<32x10xf32, #tpu.memory_space<vmem>>, vector<32x10xf32>
    tpu.vector_store %arg4[%c0_9, %c0_10], %16 {strides = array<i32>} : memref<32x10xf32, #tpu.memory_space<vmem>>, vector<32x10xf32>,
    return
  }
  func.func @transform_0(%arg0: i32) -> (i32, i32) {
    %c0_i32 = arith.constant 0 : i32
    %c0_i32_0 = arith.constant 0 : i32
    return %arg0, %c0_i32 : i32, i32
  }
  func.func @transform_1(%arg0: i32) -> (i32, i32) {
    %c0_i32 = arith.constant 0 : i32
    %c0_i32_0 = arith.constant 0 : i32
    %c0_i32_1 = arith.constant 0 : i32
    return %c0_i32, %c0_i32_0 : i32, i32
  }
  func.func @transform_2(%arg0: i32) -> (i32, i32) {
    %c0_i32 = arith.constant 0 : i32
    %c0_i32_0 = arith.constant 0 : i32
    %c0_i32_1 = arith.constant 0 : i32
    return %c0_i32, %c0_i32_0 : i32, i32
  }
  func.func @transform_3(%arg0: i32) -> (i32, i32) {
    %c0_i32 = arith.constant 0 : i32
    %c0_i32_0 = arith.constant 0 : i32
    return %arg0, %c0_i32 : i32, i32
  }
  func.func @transform_4(%arg0: i32) -> (i32, i32) {
    %c0_i32 = arith.constant 0 : i32
    %c0_i32_0 = arith.constant 0 : i32
    return %arg0, %c0_i32 : i32, i32
  }
}

</mosaic_0001>

<llo_original>
// kernel: tpu_custom_call.1
$region0: #{tpu_custom_call.1}
  #allocation0 [shape = 'u32[]', space=smem, size = 0x4, offset = 0x4, fixed_abs, tag = 'smem constant byte address 0x4 - core index']
  #allocation1 [shape = 'u32[144,128]{1,0:T(1,128)}', space=vmem, size = 0x12000, scoped, tag = 'internal scratch']
  %s0 = inlined_call_operand.vmem [shape: f32[80,32], index: 0, kind: input, shape index: {}]
  %s1 = inlined_call_operand.vmem [shape: f32[32,10], index: 1, kind: input, shape index: {}]
  %s2 = inlined_call_operand.vmem [shape: f32[1,10], index: 2, kind: input, shape index: {}]
  %s3 = inlined_call_operand.vmem [shape: f32[80,10], index: 3, kind: output, shape index: {0}]
  %s4 = inlined_call_operand.vmem [shape: f32[80,10], index: 4, kind: output, shape index: {1}]
  %5 = xla_tuple %s3, %s4
  %s6 = sld [smem:[#allocation0]]
  $region149: #{tpu_custom_call.1} parent=0
    _
  %s8 = ssub.s32 1, %s6
  %s9 = scalar_select 0, %s8, %s6
  $region1: #{tpu_custom_call.1} parent=0
    #allocation2 [shape = 'u8[32768]{0}', space=vmem, size = 0x8000, scoped, tag = 'output window, operand 0']
    #allocation3 [shape = 'u8[32768]{0}', space=vmem, size = 0x8000, scoped, tag = 'output window, operand 1']
    loop: start=0, step=1, limit=5
    $region2: #{tpu_custom_call.1} parent=1 // loop_pre_header
      _
    $region3: #{tpu_custom_call.1} parent=1 // loop_header
      %s11 = sphi 0, %s15
      %p12 = scmp.ge.s32.totalorder %s11, 5
      %s21 = sphi 0, %s23
      %s24 = sphi 0, %s21
      %s25 = sphi 0, %s24
      %s41 = sphi 0, %s25
      %s45 = sphi 0, %s45
      %s47 = sphi 0, %s45
      %s48 = sphi 0, %s47
      %s62 = sphi 0, %s48
      %s66 = sphi 0, %s66
      %s68 = sphi 0, %s66
      %s69 = sphi 0, %s68
      %s83 = sphi 0, %s69
      %s89 = sphi 0, %s91
      %s92 = sphi 0, %s89
      %s93 = sphi 0, %s92
      %s109 = sphi 0, %s93
      %s115 = sphi 0, %s117
      %s118 = sphi 0, %s115
      %s119 = sphi 0, %s118
      %s135 = sphi 0, %s119
    $region4: #{tpu_custom_call.1} parent=1 // loop_header_branch
      %14 = sbr.rel (%p12) target = $region8
    $region5: #{tpu_custom_call.1} parent=1 // loop_body
      %s16 = ssub.s32 %s11, 1
      %s17 = ssub.s32 %s11, 2
      %s18 = sadd.s32 %s11, 1
      %s19 = ssub.s32 %s11, %s18
      %p20 = scmp.eq.s32.totalorder %s19, 0
      %s22 = sadd.s32 %s21, 1
      %s23 = scalar_select %p20, %s21, %s22
      %p26 = pneg %p20
      %p27 = scmp.eq.s32.totalorder %s11, 2
      %p28 = por %p26, %p27
      %p29 = scmp.ne.s32.totalorder %s21, %s24
      %p30 = scmp.eq.s32.totalorder %s11, 0
      %p31 = por %p29, %p30
      %p32 = scmp.ne.s32.totalorder %s21, %s24
      %p33 = scmp.eq.s32.totalorder %s16, 2
      %p34 = por %p32, %p33
      %p35 = scmp.ne.s32.totalorder %s24, %s25
      %p36 = scmp.eq.s32.totalorder %s16, 0
      %p37 = por %p35, %p36
      %p38 = scmp.ne.s32.totalorder %s24, %s25
      %p39 = scmp.eq.s32.totalorder %s17, 2
      %p40 = por %p38, %p39
      %p42 = scmp.ne.s32.totalorder %s25, %s41
      %p43 = scmp.eq.s32.totalorder %s17, 0
      %p44 = por %p42, %p43
      %s46 = sadd.s32 %s45, 1
      %p49 = scmp.eq.s32.totalorder %s11, 2
      %p50 = scmp.ne.s32.totalorder %s45, %s47
      %p51 = scmp.eq.s32.totalorder %s11, 0
      %p52 = por %p50, %p51
      %p53 = scmp.ne.s32.totalorder %s45, %s47
      %p54 = scmp.eq.s32.totalorder %s16, 2
      %p55 = por %p53, %p54
      %p56 = scmp.ne.s32.totalorder %s47, %s48
      %p57 = scmp.eq.s32.totalorder %s16, 0
      %p58 = por %p56, %p57
      %p59 = scmp.ne.s32.totalorder %s47, %s48
      %p60 = scmp.eq.s32.totalorder %s17, 2
      %p61 = por %p59, %p60
      %p63 = scmp.ne.s32.totalorder %s48, %s62
      %p64 = scmp.eq.s32.totalorder %s17, 0
      %p65 = por %p63, %p64
      %s67 = sadd.s32 %s66, 1
      %p70 = scmp.eq.s32.totalorder %s11, 2
      %p71 = scmp.ne.s32.totalorder %s66, %s68
      %p72 = scmp.eq.s32.totalorder %s11, 0
      %p73 = por %p71, %p72
      %p74 = scmp.ne.s32.totalorder %s66, %s68
      %p75 = scmp.eq.s32.totalorder %s16, 2
      %p76 = por %p74, %p75
      %p77 = scmp.ne.s32.totalorder %s68, %s69
      %p78 = scmp.eq.s32.totalorder %s16, 0
      %p79 = por %p77, %p78
      %p80 = scmp.ne.s32.totalorder %s68, %s69
      %p81 = scmp.eq.s32.totalorder %s17, 2
      %p82 = por %p80, %p81
      %p84 = scmp.ne.s32.totalorder %s69, %s83
      %p85 = scmp.eq.s32.totalorder %s17, 0
      %p86 = por %p84, %p85
      %s87 = ssub.s32 %s11, %s18
      %p88 = scmp.eq.s32.totalorder %s87, 0
      %s90 = sadd.s32 %s89, 1
      %s91 = scalar_select %p88, %s89, %s90
      %p94 = pneg %p88
      %p95 = scmp.eq.s32.totalorder %s11, 2
      %p96 = por %p94, %p95
      %p97 = scmp.ne.s32.totalorder %s89, %s92
      %p98 = scmp.eq.s32.totalorder %s11, 0
      %p99 = por %p97, %p98
      %p100 = scmp.ne.s32.totalorder %s89, %s92
      %p101 = scmp.eq.s32.totalorder %s16, 2
      %p102 = por %p100, %p101
      %p103 = scmp.ne.s32.totalorder %s92, %s93
      %p104 = scmp.eq.s32.totalorder %s16, 0
      %p105 = por %p103, %p104
      %p106 = scmp.ne.s32.totalorder %s92, %s93
      %p107 = scmp.eq.s32.totalorder %s17, 2
      %p108 = por %p106, %p107
      %p110 = scmp.ne.s32.totalorder %s93, %s109
      %p111 = scmp.eq.s32.totalorder %s17, 0
      %p112 = por %p110, %p111
      %s113 = ssub.s32 %s11, %s18
      %p114 = scmp.eq.s32.totalorder %s113, 0
      %s116 = sadd.s32 %s115, 1
      %s117 = scalar_select %p114, %s115, %s116
      %p120 = pneg %p114
      %p121 = scmp.eq.s32.totalorder %s11, 2
      %p122 = por %p120, %p121
      %p123 = scmp.ne.s32.totalorder %s115, %s118
      %p124 = scmp.eq.s32.totalorder %s11, 0
      %p125 = por %p123, %p124
      %p126 = scmp.ne.s32.totalorder %s115, %s118
      %p127 = scmp.eq.s32.totalorder %s16, 2
      %p128 = por %p126, %p127
      %p129 = scmp.ne.s32.totalorder %s118, %s119
      %p130 = scmp.eq.s32.totalorder %s16, 0
      %p131 = por %p129, %p130
      %p132 = scmp.ne.s32.totalorder %s118, %s119
      %p133 = scmp.eq.s32.totalorder %s17, 2
      %p134 = por %p132, %p133
      %p136 = scmp.ne.s32.totalorder %s119, %s135
      %p137 = scmp.eq.s32.totalorder %s17, 0
      %p138 = por %p136, %p137
      %p139 = scmp.le.s32.totalorder 1, %s11
      %p140 = scmp.lt.s32.totalorder %s11, 4
      %p141 = pnand %p139, %p140
      %p142 = pneg %p141
      // Predicated region
      $region9: #{tpu_custom_call.1} parent=5 // pred_check
        _
      $region10: #{tpu_custom_call.1} parent=5 // pred_check_branch
        %144 = sbr.rel (%p141) target = $region12
      $region11: #{tpu_custom_call.1} parent=5 // pred_region
        %s145 = ssub.s32 %s11, 1
        // Predicated region
        $region13: #{tpu_custom_call.1} parent=11 // pred_check
          %p146 = pneg %p58
        $region14: #{tpu_custom_call.1} parent=11 // pred_check_branch
          %148 = sbr.rel (%p146) target = $region16
        $region15: #{tpu_custom_call.1} parent=11 // pred_region
          _
        $region16: #{tpu_custom_call.1} parent=11 // pred_fallthru
          _
        // Predicated region
        $region17: #{tpu_custom_call.1} parent=11 // pred_check
          %p149 = pneg %p79
        $region18: #{tpu_custom_call.1} parent=11 // pred_check_branch
          %151 = sbr.rel (%p149) target = $region20
        $region19: #{tpu_custom_call.1} parent=11 // pred_region
          _
        $region20: #{tpu_custom_call.1} parent=11 // pred_fallthru
          _
      $region12: #{tpu_custom_call.1} parent=5 // pred_fallthru
        _
      %p152 = scmp.lt.s32.totalorder %s11, 3
      // Predicated region
      $region21: #{tpu_custom_call.1} parent=5 // pred_check
        %p153 = pneg %p152
      $region22: #{tpu_custom_call.1} parent=5 // pred_check_branch
        %155 = sbr.rel (%p153) target = $region24
      $region23: #{tpu_custom_call.1} parent=5 // pred_region
        // Predicated region
        $region25: #{tpu_custom_call.1} parent=23 // pred_check
          %p156 = pneg %p31
        $region26: #{tpu_custom_call.1} parent=23 // pred_check_branch
          %158 = sbr.rel (%p156) target = $region28
        $region27: #{tpu_custom_call.1} parent=23 // pred_region
          %s159 = smul.u32 4, %s11
          %s160 = ssub.s32 10, %s159
          %p161 = scmp.lt.s32.totalorder %s160, 4
          %s162 = scalar_select %p161, %s160, 4
          %s163 = smul.u32 128, %s162
          %p164 = scmp.lt.s32.totalorder %s159, 9
          %s165 = scalar_select %p164, %s159, 9
          %s166 = smul.addr %s165, 8
          %s167 = scalar_lea.vmem %s0, %s166
          %s168 = smul.u32 4, %s11
          %s169 = ssub.s32 10, %s168
          %p170 = scmp.lt.s32.totalorder %s169, 4
          %s171 = scalar_select %p170, %s169, 4
          %s172 = smul.u32 128, %s171
        $region28: #{tpu_custom_call.1} parent=23 // pred_fallthru
          _
      $region24: #{tpu_custom_call.1} parent=5 // pred_fallthru
        _
      %p173 = scmp.le.s32.totalorder 1, %s11
      %p174 = scmp.lt.s32.totalorder %s11, 4
      %p175 = pnand %p173, %p174
      %p176 = pneg %p175
      // Predicated region
      $region29: #{tpu_custom_call.1} parent=5 // pred_check
        _
      $region30: #{tpu_custom_call.1} parent=5 // pred_check_branch
        %178 = sbr.rel (%p175) target = $region32
      $region31: #{tpu_custom_call.1} parent=5 // pred_region
        %s179 = ssub.s32 %s11, 1
        %s180 = smul.u32 4, %s16
        %s181 = ssub.s32 10, %s180
        %p182 = scmp.lt.s32.totalorder %s181, 4
        %s183 = scalar_select %p182, %s181, 4
        %s184 = smul.u32 128, %s183
        %p185 = scmp.lt.s32.totalorder %s180, 9
        %s186 = scalar_select %p185, %s180, 9
        %s187 = smul.addr %s186, 8
        %s188 = scalar_lea.vmem %s0, %s187
        %p189 = pneg %p37
        %p190 = pneg %p34
        %p191 = pneg %p58
        %p192 = pneg %p55
        %p193 = pneg %p79
        %p194 = pneg %p76
        %p195 = pneg %p105
        %p196 = pneg %p102
        %s197 = sand.u32 %s92, 1
        %s198 = sand.u32 %s92, 1
        %s199 = smul.addr %s198, 32
        %s200 = scalar_lea.vmem [#allocation2], %s199
        %p201 = pneg %p131
        %p202 = pneg %p128
        %s203 = sand.u32 %s118, 1
        %s204 = sand.u32 %s118, 1
        %s205 = smul.addr %s204, 32
        %s206 = scalar_lea.vmem [#allocation3], %s205
        %s207 = smul.u32 4, %s16
        %s208 = ssub.s32 10, %s207
        %p209 = scmp.lt.s32.totalorder %s208, 4
        %s210 = scalar_select %p209, %s208, 4
        %s211 = smul.u32 128, %s210
        %p212 = scmp.lt.s32.totalorder %s207, 9
        %s213 = scalar_select %p212, %s207, 9
        %s214 = smul.addr %s213, 8
        %s215 = scalar_lea.vmem %s0, %s214
        %s216 = smul.u32 4, %s16
        %s217 = ssub.s32 10, %s216
        %p218 = scmp.lt.s32.totalorder %s217, 4
        %s219 = scalar_select %p218, %s217, 4
        %s220 = smul.u32 128, %s219
        %s221 = smul.u32 4, %s16
        %s222 = ssub.s32 10, %s221
        %p223 = scmp.lt.s32.totalorder %s222, 4
        %s224 = scalar_select %p223, %s222, 4
        %s225 = smul.u32 128, %s224
        %s226 = smul.u32 4, %s16
        %s227 = ssub.s32 10, %s226
        %p228 = scmp.lt.s32.totalorder %s227, 4
        %s229 = scalar_select %p228, %s227, 4
        %s230 = smul.u32 128, %s229
        %v231 = vld [vmem:[%s215] sm:$0xff]
        %v232 = vld [vmem:[%s215 + $0x8] sm:$0xff]
        %v233 = vld [vmem:[%s215 + $0x10] sm:$0xff]
        %v234 = vld [vmem:[%s215 + $0x18] sm:$0xff]
        %v235 = vld [vmem:[%s1] sm:$0xff]
        %v236 = vld [vmem:[%s1 + $0x8] sm:$0xff]
        %v237 = vld [vmem:[%s1 + $0x10] sm:$0xff]
        %v238 = vld [vmem:[%s1 + $0x18] sm:$0xff]
        %v239 = vld [vmem:[%s2] sm:$0x1]
        %v241 = vlaneseq
        %v242 = vshrl.u32 %v241, 7
        %v243 = vsub.s32 0, %v242
        %v244 = vrot.slane %v239, %v243
        %vm246 = vcmask 261120
        %v248 = vsel %vm246, %v231, 0
        %v251 = vsel %vm246, %v232, 0
        %v254 = vsel %vm246, %v233, 0
        %v257 = vsel %vm246, %v234, 0
        %259 = vmatprep.subr.mxu0 0.0
        %260 = vmatpush1.msra.mxu0 %v235
        %261 = vmatprep.subr.mxu0 0.0
        %262 = vmatpush1.msra.mxu0 %v236
        %263 = vmatprep.subr.mxu0 0.0
        %264 = vmatpush1.msra.mxu0 %v237
        %265 = vmatprep.subr.mxu0 0.0
        %266 = vmatpush1.msra.mxu0 %v238
        %267 = vmatprep.subr.mxu0 0.0
        %268 = vmatpush1.msra.mxu0 0.0
        %269 = vmatprep.subr.mxu0 0.0
        %270 = vmatpush1.msra.mxu0 0.0
        %271 = vmatprep.subr.mxu0 0.0
        %272 = vmatpush1.msra.mxu0 0.0
        %273 = vmatprep.subr.mxu0 0.0
        %274 = vmatpush1.msra.mxu0 0.0
        %275 = vmatprep.subr.mxu0 0.0
        %276 = vmatpush1.msra.mxu0 0.0
        %277 = vmatprep.subr.mxu0 0.0
        %278 = vmatpush1.msra.mxu0 0.0
        %279 = vmatprep.subr.mxu0 0.0
        %280 = vmatpush1.msra.mxu0 0.0
        %281 = vmatprep.subr.mxu0 0.0
        %282 = vmatpush1.msra.mxu0 0.0
        %283 = vmatprep.subr.mxu0 0.0
        %284 = vmatpush1.msra.mxu0 0.0
        %285 = vmatprep.subr.mxu0 0.0
        %286 = vmatpush1.msra.mxu0 0.0
        %287 = vmatprep.subr.mxu0 0.0
        %288 = vmatpush1.msra.mxu0 0.0
        %289 = vmatprep.subr.mxu0 0.0
        %290 = vmatpush1.msra.mxu0 0.0
        %291 = vmatprep.subr.mxu0 0.0
        %292 = vmatpush1.msra.mxu0 0.0
        %293 = vmatprep.subr.mxu0 0.0
        %294 = vmatpush1.msra.mxu0 0.0
        %295 = vmatprep.subr.mxu0 0.0
        %296 = vmatpush1.msra.mxu0 0.0
        %297 = vmatprep.subr.mxu0 0.0
        %298 = vmatpush1.msra.mxu0 0.0
        %299 = vmatprep.subr.mxu0 0.0
        %300 = vmatpush1.msra.mxu0 0.0
        %301 = vmatprep.subr.mxu0 0.0
        %302 = vmatpush1.msra.mxu0 0.0
        %303 = vmatprep.subr.mxu0 0.0
        %304 = vmatpush1.msra.mxu0 0.0
        %305 = vmatprep.subr.mxu0 0.0
        %306 = vmatpush1.msra.mxu0 0.0
        %307 = vmatprep.subr.mxu0 0.0
        %308 = vmatpush1.msra.mxu0 0.0
        %309 = vmatprep.subr.mxu0 0.0
        %310 = vmatpush1.msra.mxu0 0.0
        %311 = vmatprep.subr.mxu0 0.0
        %312 = vmatpush1.msra.mxu0 0.0
        %313 = vmatprep.subr.mxu0 0.0
        %314 = vmatpush1.msra.mxu0 0.0
        %315 = vmatprep.subr.mxu0 0.0
        %316 = vmatpush1.msra.mxu0 0.0
        %317 = vmatprep.subr.mxu0 0.0
        %318 = vmatpush1.msra.mxu0 0.0
        %319 = vmatprep.subr.mxu0 0.0
        %320 = vmatpush1.msra.mxu0 0.0
        %321 = vmatprep.subr.mxu0 0.0
        %322 = vmatpush1.msra.mxu0 0.0
        %323 = vmatprep.mubr.f32.mxu0 0.0
        %324 = vmatmul.mubr.f32.gmra.mrb[0].mxu0 %v248
        %v325 = vpop.f32.mrb[0].mxu0
        %v326 = vadd.f32 %v244, %v325
        %v327 = vpop.f32.mrb[0].mxu0
        %328 = vmatprep.mubr.f32.mxu0 0.0
        %329 = vmatmul.mubr.f32.gmra.mrb[0].mxu0 %v251
        %v330 = vpop.f32.mrb[0].mxu0
        %v331 = vadd.f32 %v244, %v330
        %v332 = vpop.f32.mrb[0].mxu0
        %333 = vmatprep.mubr.f32.mxu0 0.0
        %334 = vmatmul.mubr.f32.gmra.mrb[0].mxu0 %v254
        %v335 = vpop.f32.mrb[0].mxu0
        %v336 = vadd.f32 %v244, %v335
        %v337 = vpop.f32.mrb[0].mxu0
        %338 = vmatprep.mubr.f32.mxu0 0.0
        %339 = vmatmul.mubr.f32.gmra.mrb[0].mxu0 %v257
        %v340 = vpop.f32.mrb[0].mxu0
        %v341 = vadd.f32 %v244, %v340
        %v342 = vpop.f32.mrb[0].mxu0
        %343 = vdwg.mxu0
        %vm344 = vcmask 80896
        %345 = vst.msk [vmem:[%s206] sm:$0xff] %vm344, %v326
        %346 = vst.msk [vmem:[%s206 + $0x8] sm:$0xff] %vm344, %v331
        %347 = vst.msk [vmem:[%s206 + $0x10] sm:$0xff] %vm344, %v336
        %348 = vst.msk [vmem:[%s206 + $0x18] sm:$0xff] %vm344, %v341
        %v349 = vsel %vm344, %v326, -inf
        %350 = vmax.xlane.f32.xlu0 %v349
        %v351 = vpop.xlane.xlu0 %350
        %v352 = vsel %vm344, %v331, -inf
        %353 = vmax.xlane.f32.xlu0 %v352
        %v354 = vpop.xlane.xlu0 %353
        %v355 = vsel %vm344, %v336, -inf
        %356 = vmax.xlane.f32.xlu0 %v355
        %v357 = vpop.xlane.xlu0 %356
        %v358 = vsel %vm344, %v341, -inf
        %359 = vmax.xlane.f32.xlu0 %v358
        %v360 = vpop.xlane.xlu0 %359
        %v361 = vsub.f32 %v326, %v351
        %v362 = vsub.f32 %v331, %v354
        %v363 = vsub.f32 %v336, %v357
        %v364 = vsub.f32 %v341, %v360
        %v365 = vmul.f32 %v361, 1.442695
        %v366 = vpow.pop %v365
        %v367 = vmul.f32 %v362, 1.442695
        %v368 = vpow.pop %v367
        %v369 = vmul.f32 %v363, 1.442695
        %v370 = vpow.pop %v369
        %v371 = vmul.f32 %v364, 1.442695
        %v372 = vpow.pop %v371
        %v373 = vsel %vm344, %v366, 0.0
        %374 = vadd.xlane.f32.xlu0 %v373
        %v375 = vpop.xlane.xlu0 %374
        %v376 = vsel %vm344, %v368, 0.0
        %377 = vadd.xlane.f32.xlu0 %v376
        %v378 = vpop.xlane.xlu0 %377
        %v379 = vsel %vm344, %v370, 0.0
        %380 = vadd.xlane.f32.xlu0 %v379
        %v381 = vpop.xlane.xlu0 %380
        %v382 = vsel %vm344, %v372, 0.0
        %383 = vadd.xlane.f32.xlu0 %v382
        %v384 = vpop.xlane.xlu0 %383
        %v385 = vlog2.pop %v375
        %v386 = vmul.f32 %v385, 0.6931472
        %v387 = vlog2.pop %v378
        %v388 = vmul.f32 %v387, 0.6931472
        %v389 = vlog2.pop %v381
        %v390 = vmul.f32 %v389, 0.6931472
        %v391 = vlog2.pop %v384
        %v392 = vmul.f32 %v391, 0.6931472
        %v393 = vsub.f32 %v361, %v386
        %v394 = vsub.f32 %v362, %v388
        %v395 = vsub.f32 %v363, %v390
        %v396 = vsub.f32 %v364, %v392
        %397 = vst.msk [vmem:[%s200] sm:$0xff] %vm344, %v393
        %398 = vst.msk [vmem:[%s200 + $0x8] sm:$0xff] %vm344, %v394
        %399 = vst.msk [vmem:[%s200 + $0x10] sm:$0xff] %vm344, %v395
        %400 = vst.msk [vmem:[%s200 + $0x18] sm:$0xff] %vm344, %v396
        %s401 = sand.u32 %s92, 1
        %s402 = sand.u32 %s92, 1
        %s403 = smul.addr %s402, 32
        %s404 = scalar_lea.vmem [#allocation2], %s403
        %s405 = sand.u32 %s118, 1
        %s406 = sand.u32 %s118, 1
        %s407 = smul.addr %s406, 32
        %s408 = scalar_lea.vmem [#allocation3], %s407
        // Predicated region
        $region33: #{tpu_custom_call.1} parent=31 // pred_check
          %p409 = pneg %p102
        $region34: #{tpu_custom_call.1} parent=31 // pred_check_branch
          %411 = sbr.rel (%p409) target = $region36
        $region35: #{tpu_custom_call.1} parent=31 // pred_region
          %s412 = smul.u32 4, %s16
          %s413 = ssub.s32 10, %s412
          %p414 = scmp.lt.s32.totalorder %s413, 4
          %s415 = scalar_select %p414, %s413, 4
          %s416 = smul.u32 128, %s415
          %p417 = scmp.ne.s32.totalorder 0, %s416
          %s418 = smul.addr %s412, 8
          %s419 = scalar_lea.vmem %s3, %s418
          // Predicated region
          $region37: #{tpu_custom_call.1} parent=35 // pred_check
            %p420 = pneg %p417
          $region38: #{tpu_custom_call.1} parent=35 // pred_check_branch
            %422 = sbr.rel (%p420) target = $region40
          $region39: #{tpu_custom_call.1} parent=35 // pred_region
            // Predicated region
            $region41: #{tpu_custom_call.1} parent=39 // pred_check
              _
            $region42: #{tpu_custom_call.1} parent=39 // pred_check_branch
              %424 = sbr.rel (0) target = $region44
            $region43: #{tpu_custom_call.1} parent=39 // pred_region
              // Predicated region
              $region63: #{tpu_custom_call.1} parent=43 // pred_check
                _
              $region64: #{tpu_custom_call.1} parent=43 // pred_check_branch
                %479 = sbr.rel (0) target = $region66
              $region65: #{tpu_custom_call.1} parent=43 // pred_region
                %s480 = sshrl.u32 %s415, 2
                // While loop
                $region67: #{tpu_custom_call.1} parent=65 // loop_pre_header
                  _
                $region68: #{tpu_custom_call.1} parent=65 // loop_header
                  %s482 = sphi 0, %s484
                  %p483 = scmp.ge.s32.totalorder %s482, %s480
                  %s487 = sphi 0, %s500
                  %s488 = sphi %s404, %s503
                  %s489 = sphi %s419, %s504
                $region69: #{tpu_custom_call.1} parent=65 // loop_header_branch
                  %486 = sbr.rel (%p483) target = $region73
                $region70: #{tpu_custom_call.1} parent=65 // loop_body
                  %v490 = vld [vmem:[%s488] sm:$0xff]
                  %491 = vst [vmem:[%s489] sm:$0xff] %v490
                  %v492 = vld [vmem:[%s488 + $0x8] sm:$0xff]
                  %493 = vst [vmem:[%s489 + $0x8] sm:$0xff] %v492
                  %v494 = vld [vmem:[%s488 + $0x10] sm:$0xff]
                  %495 = vst [vmem:[%s489 + $0x10] sm:$0xff] %v494
                  %v496 = vld [vmem:[%s488 + $0x18] sm:$0xff]
                  %497 = vst [vmem:[%s489 + $0x18] sm:$0xff] %v496
                  %s498 = sadd.s32 1, %s487
                  %p499 = scmp.ge.s32.totalorder %s498, %s480
                  %s500 = scalar_select %p499, 0, %s498
                  %s501 = smul.u32 %s500, 32
                  %s502 = smul.u32 %s500, 32
                  %s503 = scalar_lea.vmem %s404, %s501 [#allocation2]
                  %s504 = scalar_lea.vmem %s419, %s502
                $region71: #{tpu_custom_call.1} parent=65 // loop_footer
                  %s484 = sadd.s32 %s482, 1
                $region72: #{tpu_custom_call.1} parent=65 // loop_footer_branch
                  %481 = sbr.rel target = $region68
                $region73: #{tpu_custom_call.1} parent=65 // loop_exit
                  _
                %s505 = sshrl.u32 %s415, 2
                %s506 = sand.u32 %s415, 3
                %s507 = smul.u32 %s505, 4
                %s508 = smul.u32 8, %s507
                %s509 = scalar_lea.vmem %s404, %s508 [#allocation2]
                %s510 = smul.u32 8, %s507
                %s511 = scalar_lea.vmem %s419, %s510
                // While loop
                $region74: #{tpu_custom_call.1} parent=65 // loop_pre_header
                  _
                $region75: #{tpu_custom_call.1} parent=65 // loop_header
                  %s513 = sphi 0, %s515
                  %p514 = scmp.ge.s32.totalorder %s513, %s506
                  %s518 = sphi 0, %s525
                  %s519 = sphi %s509, %s528
                  %s520 = sphi %s511, %s529
                $region76: #{tpu_custom_call.1} parent=65 // loop_header_branch
                  %517 = sbr.rel (%p514) target = $region80
                $region77: #{tpu_custom_call.1} parent=65 // loop_body
                  %v521 = vld [vmem:[%s519] sm:$0xff]
                  %522 = vst [vmem:[%s520] sm:$0xff] %v521
                  %s523 = sadd.s32 1, %s518
                  %p524 = scmp.ge.s32.totalorder %s523, %s506
                  %s525 = scalar_select %p524, 0, %s523
                  %s526 = smul.u32 %s525, 8
                  %s527 = smul.u32 %s525, 8
                  %s528 = scalar_lea.vmem %s509, %s526 [#allocation2]
                  %s529 = scalar_lea.vmem %s511, %s527
                $region78: #{tpu_custom_call.1} parent=65 // loop_footer
                  %s515 = sadd.s32 %s513, 1
                $region79: #{tpu_custom_call.1} parent=65 // loop_footer_branch
                  %512 = sbr.rel target = $region75
                $region80: #{tpu_custom_call.1} parent=65 // loop_exit
                  _
              $region66: #{tpu_custom_call.1} parent=43 // pred_fallthru
                _
              // Predicated region
              $region81: #{tpu_custom_call.1} parent=43 // pred_check
                _
              $region82: #{tpu_custom_call.1} parent=43 // pred_check_branch
                %531 = sbr.rel target = $region84
              $region83: #{tpu_custom_call.1} parent=43 // pred_region
                _
              $region84: #{tpu_custom_call.1} parent=43 // pred_fallthru
                _
            $region44: #{tpu_custom_call.1} parent=39 // pred_fallthru
              _
            // Predicated region
            $region45: #{tpu_custom_call.1} parent=39 // pred_check
              _
            $region46: #{tpu_custom_call.1} parent=39 // pred_check_branch
              %426 = sbr.rel target = $region48
            $region47: #{tpu_custom_call.1} parent=39 // pred_region
              %s428 = sshrl.u32 %s415, 2
              // While loop
              $region49: #{tpu_custom_call.1} parent=47 // loop_pre_header
                _
              $region50: #{tpu_custom_call.1} parent=47 // loop_header
                %s430 = sphi 0, %s432
                %p431 = scmp.ge.s32.totalorder %s430, %s428
                %s435 = sphi 0, %s448
                %s436 = sphi %s404, %s451
                %s437 = sphi %s419, %s452
              $region51: #{tpu_custom_call.1} parent=47 // loop_header_branch
                %434 = sbr.rel (%p431) target = $region55
              $region52: #{tpu_custom_call.1} parent=47 // loop_body
                %v438 = vld [vmem:[%s436] sm:$0xff]
                %439 = vst [vmem:[%s437] sm:$0xff] %v438
                %v440 = vld [vmem:[%s436 + $0x8] sm:$0xff]
                %441 = vst [vmem:[%s437 + $0x8] sm:$0xff] %v440
                %v442 = vld [vmem:[%s436 + $0x10] sm:$0xff]
                %443 = vst [vmem:[%s437 + $0x10] sm:$0xff] %v442
                %v444 = vld [vmem:[%s436 + $0x18] sm:$0xff]
                %445 = vst [vmem:[%s437 + $0x18] sm:$0xff] %v444
                %s446 = sadd.s32 1, %s435
                %p447 = scmp.ge.s32.totalorder %s446, %s428
                %s448 = scalar_select %p447, 0, %s446
                %s449 = smul.u32 %s448, 32
                %s450 = smul.u32 %s448, 32
                %s451 = scalar_lea.vmem %s404, %s449 [#allocation2]
                %s452 = scalar_lea.vmem %s419, %s450
              $region53: #{tpu_custom_call.1} parent=47 // loop_footer
                %s432 = sadd.s32 %s430, 1
              $region54: #{tpu_custom_call.1} parent=47 // loop_footer_branch
                %429 = sbr.rel target = $region50
              $region55: #{tpu_custom_call.1} parent=47 // loop_exit
                _
              %s453 = sshrl.u32 %s415, 2
              %s454 = sand.u32 %s415, 3
              %s455 = smul.u32 %s453, 4
              %s456 = smul.u32 8, %s455
              %s457 = scalar_lea.vmem %s404, %s456 [#allocation2]
              %s458 = smul.u32 8, %s455
              %s459 = scalar_lea.vmem %s419, %s458
              // While loop
              $region56: #{tpu_custom_call.1} parent=47 // loop_pre_header
                _
              $region57: #{tpu_custom_call.1} parent=47 // loop_header
                %s461 = sphi 0, %s463
                %p462 = scmp.ge.s32.totalorder %s461, %s454
                %s466 = sphi 0, %s473
                %s467 = sphi %s457, %s476
                %s468 = sphi %s459, %s477
              $region58: #{tpu_custom_call.1} parent=47 // loop_header_branch
                %465 = sbr.rel (%p462) target = $region62
              $region59: #{tpu_custom_call.1} parent=47 // loop_body
                %v469 = vld [vmem:[%s467] sm:$0xff]
                %470 = vst [vmem:[%s468] sm:$0xff] %v469
                %s471 = sadd.s32 1, %s466
                %p472 = scmp.ge.s32.totalorder %s471, %s454
                %s473 = scalar_select %p472, 0, %s471
                %s474 = smul.u32 %s473, 8
                %s475 = smul.u32 %s473, 8
                %s476 = scalar_lea.vmem %s457, %s474 [#allocation2]
                %s477 = scalar_lea.vmem %s459, %s475
              $region60: #{tpu_custom_call.1} parent=47 // loop_footer
                %s463 = sadd.s32 %s461, 1
              $region61: #{tpu_custom_call.1} parent=47 // loop_footer_branch
                %460 = sbr.rel target = $region57
              $region62: #{tpu_custom_call.1} parent=47 // loop_exit
                _
            $region48: #{tpu_custom_call.1} parent=39 // pred_fallthru
              _
          $region40: #{tpu_custom_call.1} parent=35 // pred_fallthru
            _
          %532 = vnop
        $region36: #{tpu_custom_call.1} parent=31 // pred_fallthru
          _
        // Predicated region
        $region85: #{tpu_custom_call.1} parent=31 // pred_check
          %p533 = pneg %p128
        $region86: #{tpu_custom_call.1} parent=31 // pred_check_branch
          %535 = sbr.rel (%p533) target = $region88
        $region87: #{tpu_custom_call.1} parent=31 // pred_region
          %s536 = smul.u32 4, %s16
          %s537 = ssub.s32 10, %s536
          %p538 = scmp.lt.s32.totalorder %s537, 4
          %s539 = scalar_select %p538, %s537, 4
          %s540 = smul.u32 128, %s539
          %p541 = scmp.ne.s32.totalorder 0, %s540
          %s542 = smul.addr %s536, 8
          %s543 = scalar_lea.vmem %s4, %s542
          // Predicated region
          $region89: #{tpu_custom_call.1} parent=87 // pred_check
            %p544 = pneg %p541
          $region90: #{tpu_custom_call.1} parent=87 // pred_check_branch
            %546 = sbr.rel (%p544) target = $region92
          $region91: #{tpu_custom_call.1} parent=87 // pred_region
            // Predicated region
            $region93: #{tpu_custom_call.1} parent=91 // pred_check
              _
            $region94: #{tpu_custom_call.1} parent=91 // pred_check_branch
              %548 = sbr.rel (0) target = $region96
            $region95: #{tpu_custom_call.1} parent=91 // pred_region
              // Predicated region
              $region115: #{tpu_custom_call.1} parent=95 // pred_check
                _
              $region116: #{tpu_custom_call.1} parent=95 // pred_check_branch
                %603 = sbr.rel (0) target = $region118
              $region117: #{tpu_custom_call.1} parent=95 // pred_region
                %s604 = sshrl.u32 %s539, 2
                // While loop
                $region119: #{tpu_custom_call.1} parent=117 // loop_pre_header
                  _
                $region120: #{tpu_custom_call.1} parent=117 // loop_header
                  %s606 = sphi 0, %s608
                  %p607 = scmp.ge.s32.totalorder %s606, %s604
                  %s611 = sphi 0, %s624
                  %s612 = sphi %s408, %s627
                  %s613 = sphi %s543, %s628
                $region121: #{tpu_custom_call.1} parent=117 // loop_header_branch
                  %610 = sbr.rel (%p607) target = $region125
                $region122: #{tpu_custom_call.1} parent=117 // loop_body
                  %v614 = vld [vmem:[%s612] sm:$0xff]
                  %615 = vst [vmem:[%s613] sm:$0xff] %v614
                  %v616 = vld [vmem:[%s612 + $0x8] sm:$0xff]
                  %617 = vst [vmem:[%s613 + $0x8] sm:$0xff] %v616
                  %v618 = vld [vmem:[%s612 + $0x10] sm:$0xff]
                  %619 = vst [vmem:[%s613 + $0x10] sm:$0xff] %v618
                  %v620 = vld [vmem:[%s612 + $0x18] sm:$0xff]
                  %621 = vst [vmem:[%s613 + $0x18] sm:$0xff] %v620
                  %s622 = sadd.s32 1, %s611
                  %p623 = scmp.ge.s32.totalorder %s622, %s604
                  %s624 = scalar_select %p623, 0, %s622
                  %s625 = smul.u32 %s624, 32
                  %s626 = smul.u32 %s624, 32
                  %s627 = scalar_lea.vmem %s408, %s625 [#allocation3]
                  %s628 = scalar_lea.vmem %s543, %s626
                $region123: #{tpu_custom_call.1} parent=117 // loop_footer
                  %s608 = sadd.s32 %s606, 1
                $region124: #{tpu_custom_call.1} parent=117 // loop_footer_branch
                  %605 = sbr.rel target = $region120
                $region125: #{tpu_custom_call.1} parent=117 // loop_exit
                  _
                %s629 = sshrl.u32 %s539, 2
                %s630 = sand.u32 %s539, 3
                %s631 = smul.u32 %s629, 4
                %s632 = smul.u32 8, %s631
                %s633 = scalar_lea.vmem %s408, %s632 [#allocation3]
                %s634 = smul.u32 8, %s631
                %s635 = scalar_lea.vmem %s543, %s634
                // While loop
                $region126: #{tpu_custom_call.1} parent=117 // loop_pre_header
                  _
                $region127: #{tpu_custom_call.1} parent=117 // loop_header
                  %s637 = sphi 0, %s639
                  %p638 = scmp.ge.s32.totalorder %s637, %s630
                  %s642 = sphi 0, %s649
                  %s643 = sphi %s633, %s652
                  %s644 = sphi %s635, %s653
                $region128: #{tpu_custom_call.1} parent=117 // loop_header_branch
                  %641 = sbr.rel (%p638) target = $region132
                $region129: #{tpu_custom_call.1} parent=117 // loop_body
                  %v645 = vld [vmem:[%s643] sm:$0xff]
                  %646 = vst [vmem:[%s644] sm:$0xff] %v645
                  %s647 = sadd.s32 1, %s642
                  %p648 = scmp.ge.s32.totalorder %s647, %s630
                  %s649 = scalar_select %p648, 0, %s647
                  %s650 = smul.u32 %s649, 8
                  %s651 = smul.u32 %s649, 8
                  %s652 = scalar_lea.vmem %s633, %s650 [#allocation3]
                  %s653 = scalar_lea.vmem %s635, %s651
                $region130: #{tpu_custom_call.1} parent=117 // loop_footer
                  %s639 = sadd.s32 %s637, 1
                $region131: #{tpu_custom_call.1} parent=117 // loop_footer_branch
                  %636 = sbr.rel target = $region127
                $region132: #{tpu_custom_call.1} parent=117 // loop_exit
                  _
              $region118: #{tpu_custom_call.1} parent=95 // pred_fallthru
                _
              // Predicated region
              $region133: #{tpu_custom_call.1} parent=95 // pred_check
                _
              $region134: #{tpu_custom_call.1} parent=95 // pred_check_branch
                %655 = sbr.rel target = $region136
              $region135: #{tpu_custom_call.1} parent=95 // pred_region
                _
              $region136: #{tpu_custom_call.1} parent=95 // pred_fallthru
                _
            $region96: #{tpu_custom_call.1} parent=91 // pred_fallthru
              _
            // Predicated region
            $region97: #{tpu_custom_call.1} parent=91 // pred_check
              _
            $region98: #{tpu_custom_call.1} parent=91 // pred_check_branch
              %550 = sbr.rel target = $region100
            $region99: #{tpu_custom_call.1} parent=91 // pred_region
              %s552 = sshrl.u32 %s539, 2
              // While loop
              $region101: #{tpu_custom_call.1} parent=99 // loop_pre_header
                _
              $region102: #{tpu_custom_call.1} parent=99 // loop_header
                %s554 = sphi 0, %s556
                %p555 = scmp.ge.s32.totalorder %s554, %s552
                %s559 = sphi 0, %s572
                %s560 = sphi %s408, %s575
                %s561 = sphi %s543, %s576
              $region103: #{tpu_custom_call.1} parent=99 // loop_header_branch
                %558 = sbr.rel (%p555) target = $region107
              $region104: #{tpu_custom_call.1} parent=99 // loop_body
                %v562 = vld [vmem:[%s560] sm:$0xff]
                %563 = vst [vmem:[%s561] sm:$0xff] %v562
                %v564 = vld [vmem:[%s560 + $0x8] sm:$0xff]
                %565 = vst [vmem:[%s561 + $0x8] sm:$0xff] %v564
                %v566 = vld [vmem:[%s560 + $0x10] sm:$0xff]
                %567 = vst [vmem:[%s561 + $0x10] sm:$0xff] %v566
                %v568 = vld [vmem:[%s560 + $0x18] sm:$0xff]
                %569 = vst [vmem:[%s561 + $0x18] sm:$0xff] %v568
                %s570 = sadd.s32 1, %s559
                %p571 = scmp.ge.s32.totalorder %s570, %s552
                %s572 = scalar_select %p571, 0, %s570
                %s573 = smul.u32 %s572, 32
                %s574 = smul.u32 %s572, 32
                %s575 = scalar_lea.vmem %s408, %s573 [#allocation3]
                %s576 = scalar_lea.vmem %s543, %s574
              $region105: #{tpu_custom_call.1} parent=99 // loop_footer
                %s556 = sadd.s32 %s554, 1
              $region106: #{tpu_custom_call.1} parent=99 // loop_footer_branch
                %553 = sbr.rel target = $region102
              $region107: #{tpu_custom_call.1} parent=99 // loop_exit
                _
              %s577 = sshrl.u32 %s539, 2
              %s578 = sand.u32 %s539, 3
              %s579 = smul.u32 %s577, 4
              %s580 = smul.u32 8, %s579
              %s581 = scalar_lea.vmem %s408, %s580 [#allocation3]
              %s582 = smul.u32 8, %s579
              %s583 = scalar_lea.vmem %s543, %s582
              // While loop
              $region108: #{tpu_custom_call.1} parent=99 // loop_pre_header
                _
              $region109: #{tpu_custom_call.1} parent=99 // loop_header
                %s585 = sphi 0, %s587
                %p586 = scmp.ge.s32.totalorder %s585, %s578
                %s590 = sphi 0, %s597
                %s591 = sphi %s581, %s600
                %s592 = sphi %s583, %s601
              $region110: #{tpu_custom_call.1} parent=99 // loop_header_branch
                %589 = sbr.rel (%p586) target = $region114
              $region111: #{tpu_custom_call.1} parent=99 // loop_body
                %v593 = vld [vmem:[%s591] sm:$0xff]
                %594 = vst [vmem:[%s592] sm:$0xff] %v593
                %s595 = sadd.s32 1, %s590
                %p596 = scmp.ge.s32.totalorder %s595, %s578
                %s597 = scalar_select %p596, 0, %s595
                %s598 = smul.u32 %s597, 8
                %s599 = smul.u32 %s597, 8
                %s600 = scalar_lea.vmem %s581, %s598 [#allocation3]
                %s601 = scalar_lea.vmem %s583, %s599
              $region112: #{tpu_custom_call.1} parent=99 // loop_footer
                %s587 = sadd.s32 %s585, 1
              $region113: #{tpu_custom_call.1} parent=99 // loop_footer_branch
                %584 = sbr.rel target = $region109
              $region114: #{tpu_custom_call.1} parent=99 // loop_exit
                _
            $region100: #{tpu_custom_call.1} parent=91 // pred_fallthru
              _
          $region92: #{tpu_custom_call.1} parent=87 // pred_fallthru
            _
          %656 = vnop
        $region88: #{tpu_custom_call.1} parent=31 // pred_fallthru
          _
      $region32: #{tpu_custom_call.1} parent=5 // pred_fallthru
        _
      %p657 = scmp.le.s32.totalorder 2, %s11
      // Predicated region
      $region137: #{tpu_custom_call.1} parent=5 // pred_check
        %p658 = pneg %p657
      $region138: #{tpu_custom_call.1} parent=5 // pred_check_branch
        %660 = sbr.rel (%p658) target = $region140
      $region139: #{tpu_custom_call.1} parent=5 // pred_region
        %s661 = ssub.s32 %s11, 2
        // Predicated region
        $region141: #{tpu_custom_call.1} parent=139 // pred_check
          %p662 = pneg %p108
        $region142: #{tpu_custom_call.1} parent=139 // pred_check_branch
          %664 = sbr.rel (%p662) target = $region144
        $region143: #{tpu_custom_call.1} parent=139 // pred_region
          %s665 = sand.u32 %s93, 1
          %s666 = sand.u32 %s93, 1
          %s667 = smul.addr %s666, 32
          %s668 = scalar_lea.vmem [#allocation2], %s667
        $region144: #{tpu_custom_call.1} parent=139 // pred_fallthru
          _
        // Predicated region
        $region145: #{tpu_custom_call.1} parent=139 // pred_check
          %p669 = pneg %p134
        $region146: #{tpu_custom_call.1} parent=139 // pred_check_branch
          %671 = sbr.rel (%p669) target = $region148
        $region147: #{tpu_custom_call.1} parent=139 // pred_region
          %s672 = sand.u32 %s119, 1
          %s673 = sand.u32 %s119, 1
          %s674 = smul.addr %s673, 32
          %s675 = scalar_lea.vmem [#allocation3], %s674
        $region148: #{tpu_custom_call.1} parent=139 // pred_fallthru
          _
      $region140: #{tpu_custom_call.1} parent=5 // pred_fallthru
        _
    $region6: #{tpu_custom_call.1} parent=1 // loop_footer
      %s15 = sadd.s32 1, %s11
    $region7: #{tpu_custom_call.1} parent=1 // loop_footer_branch
      %10 = sbr.rel target = $region3
    $region8: #{tpu_custom_call.1} parent=1 // loop_exit
      _

</llo_original>
